<compile_context>
chip_gen: v5e
topology: v5e:2x2
jax: 0.10.0
libtpu: 0.0.40
codegen_flags: <defaults>
</compile_context>

<pallas_src>
import functools

import jax
import jax.numpy as jnp
from jax.experimental import pallas as pl
from jax.experimental.pallas import tpu as pltpu


def lstm_kernel(x_ref, wih_ref, whh_ref, b_ref, wfc_ref, bfc_ref,
                out_ref, hn_ref, cn_ref, gx_sc, hs_sc,
                *, seq_len, batch, pad_b, hidden, n_out):
    H = hidden
    PB = pad_b  # padded (sublane-aligned) batch

    # ---- (1) Hoisted input projection: one big matmul off the serial chain.
    # gates_x = x @ W_ih^T + (b_ih + b_hh)   -> (S*PB, 4H) in VMEM.
    gx_sc[...] = (jnp.dot(x_ref[...], wih_ref[...],
                          preferred_element_type=jnp.float32)
                  + b_ref[...])

    whh = whh_ref[...]  # (H, 4H), loaded once, reused every step.

    # Lane mask selecting the g (cell) gate columns; hoisted out of the loop.
    lane = jax.lax.broadcasted_iota(jnp.int32, (PB, 4 * H), 1)
    g_mask = (lane >= 2 * H) & (lane < 3 * H)

    # ---- (2) Serial recurrence (fully unrolled; S is small and static).
    def step(t, carry):
        h_prev, c_prev = carry
        # Aligned full-tile window: PB == 8 sublanes per timestep.
        row = pl.ds(pl.multiple_of(t * PB, PB), PB)
        gates = gx_sc[row, :] + jnp.dot(h_prev, whh,
                                        preferred_element_type=jnp.float32)

        # Full-width activations (2 EUP pushes) + lane-mask select.
        # PyTorch gate order along the 4H axis: input, forget, cell(g), output.
        act = jnp.where(g_mask, jnp.tanh(gates), jax.nn.sigmoid(gates))
        i = act[:, 0 * H:1 * H]
        f = act[:, 1 * H:2 * H]
        g = act[:, 2 * H:3 * H]
        o = act[:, 3 * H:4 * H]

        c_new = f * c_prev + i * g
        h_new = o * jnp.tanh(c_new)

        hs_sc[row, :] = h_new          # one aligned store per step
        return (h_new, c_new)

    zeros = jnp.zeros((PB, H), jnp.float32)
    h_fin, c_fin = jax.lax.fori_loop(0, seq_len, step, (zeros, zeros),
                                     unroll=True)

    # ---- (3) FC output head, batched over all timesteps, after the loop.
    hs = hs_sc[...]
    if n_out == 1:
        # VPU mul + XLU lane-reduce; avoids a degenerate 1-lane MXU matmul.
        out = jnp.sum(hs * wfc_ref[...], axis=-1, keepdims=True) + bfc_ref[...]
    else:
        out = jax.lax.dot_general(hs, wfc_ref[...],
                                  (((1,), (1,)), ((), ())),
                                  preferred_element_type=jnp.float32) + bfc_ref[...]
    out_ref[...] = out

    # ---- (4) Final states: only the real batch rows, written exactly once.
    hn_ref[...] = h_fin[:batch]
    cn_ref[...] = c_fin[:batch]


def prepare_params(w_ih, w_hh, b_ih, b_hh, w_fc, b_fc):
    """One-time weight prep (transposes / bias fusion) cached outside forward."""
    return dict(
        wih_t=jnp.asarray(w_ih.T, jnp.float32),                    # (I, 4H)
        whh_t=jnp.asarray(w_hh.T, jnp.float32),                    # (H, 4H)
        b=(b_ih + b_hh).reshape(1, -1).astype(jnp.float32),        # (1, 4H)
        wfc=jnp.asarray(w_fc, jnp.float32),                        # (O, H)
        bfc=b_fc.reshape(1, -1).astype(jnp.float32),               # (1, O)
    )


@jax.jit
def lstm_rnn_forward(x, params):
    """Pallas forward of LSTM_RNN (num_layers=1). Returns (out, hn, cn).

    x is time-major (seq_len, batch, num_inputs), like nn.LSTM's default.
    # TODO(synk): caller-provided non-zero h0/c0 are not plumbed through; the
    # module's default zero-init path is implemented.
    """
    S, B, I = x.shape
    H = params["whh_t"].shape[0]
    O = params["wfc"].shape[0]
    PB = max(8, ((B + 7) // 8) * 8)   # sublane-aligned batch

    # Only per-call x-side ops: cast (no-op for f32), pad batch, flatten time.
    xp = jnp.pad(x.astype(jnp.float32), ((0, 0), (0, PB - B), (0, 0)))
    x2d = xp.reshape(S * PB, I)

    kernel = functools.partial(lstm_kernel, seq_len=S, batch=B, pad_b=PB,
                               hidden=H, n_out=O)

    out2d, hn, cn = pl.pallas_call(
        kernel,
        out_shape=(jax.ShapeDtypeStruct((S * PB, O), jnp.float32),
                   jax.ShapeDtypeStruct((B, H), jnp.float32),
                   jax.ShapeDtypeStruct((B, H), jnp.float32)),
        grid_spec=pltpu.PrefetchScalarGridSpec(
            num_scalar_prefetch=0,
            grid=(1,),
            in_specs=[
                pl.BlockSpec((S * PB, I), lambda i: (0, 0)),   # x (padded, flat)
                pl.BlockSpec((I, 4 * H), lambda i: (0, 0)),    # W_ih^T
                pl.BlockSpec((H, 4 * H), lambda i: (0, 0)),    # W_hh^T
                pl.BlockSpec((1, 4 * H), lambda i: (0, 0)),    # fused bias
                pl.BlockSpec((O, H), lambda i: (0, 0)),        # W_fc
                pl.BlockSpec((1, O), lambda i: (0, 0)),        # b_fc
            ],
            out_specs=[
                pl.BlockSpec((S * PB, O), lambda i: (0, 0)),   # out (padded, flat)
                pl.BlockSpec((B, H), lambda i: (0, 0)),        # hn
                pl.BlockSpec((B, H), lambda i: (0, 0)),        # cn
            ],
            scratch_shapes=[
                pltpu.VMEM((S * PB, 4 * H), jnp.float32),      # gates_x
                pltpu.VMEM((S * PB, H), jnp.float32),          # stacked h_t
            ],
        ),
        compiler_params=pltpu.CompilerParams(
            dimension_semantics=("arbitrary",)),
    )(x2d, params["wih_t"], params["whh_t"], params["b"],
      params["wfc"], params["bfc"])

    out = out2d.reshape(S, PB, O)[:, :B, :]
    return out, hn[None], cn[None]


def lstm_rnn_reference(x, w_ih, w_hh, b_ih, b_hh, w_fc, b_fc):
    """Pure-JAX reference matching torch.nn.LSTM + nn.Linear semantics."""
    S, B, I = x.shape
    H = w_hh.shape[1]

    def step(carry, x_t):
        h, c = carry
        gates = x_t @ w_ih.T + h @ w_hh.T + b_ih + b_hh
        i, f, g, o = jnp.split(gates, 4, axis=-1)
        c = jax.nn.sigmoid(f) * c + jax.nn.sigmoid(i) * jnp.tanh(g)
        h = jax.nn.sigmoid(o) * jnp.tanh(c)
        return (h, c), h

    (h, c), hs = jax.lax.scan(
        step, (jnp.zeros((B, H), jnp.float32), jnp.zeros((B, H), jnp.float32)), x)
    out = hs @ w_fc.T + b_fc
    return out, h[None], c[None]


if __name__ == "__main__":
    # Module hyperparameters (small, consistent with the forward pass).
    num_inputs, hidden_features, num_outputs = 4, 32, 1
    seq_len, batch = 8, 2

    key = jax.random.PRNGKey(0)
    ks = jax.random.split(key, 7)

    # Deterministic init mimicking PyTorch uniform(-1/sqrt(H), 1/sqrt(H)).
    k = 1.0 / float(jnp.sqrt(hidden_features))
    w_ih = jax.random.uniform(ks[0], (4 * hidden_features, num_inputs),
                              jnp.float32, -k, k)
    w_hh = jax.random.uniform(ks[1], (4 * hidden_features, hidden_features),
                              jnp.float32, -k, k)
    b_ih = jax.random.uniform(ks[2], (4 * hidden_features,), jnp.float32, -k, k)
    b_hh = jax.random.uniform(ks[3], (4 * hidden_features,), jnp.float32, -k, k)
    w_fc = jax.random.uniform(ks[4], (num_outputs, hidden_features),
                              jnp.float32, -k, k)
    b_fc = jax.random.uniform(ks[5], (num_outputs,), jnp.float32, -k, k)

    x = jax.random.normal(ks[6], (seq_len, batch, num_inputs), jnp.float32)

    params = prepare_params(w_ih, w_hh, b_ih, b_hh, w_fc, b_fc)  # one-time prep
    out, hn, cn = lstm_rnn_forward(x, params)
    jax.block_until_ready((out, hn, cn))

    ro, rh, rc = lstm_rnn_reference(x, w_ih, w_hh, b_ih, b_hh, w_fc, b_fc)
    assert out.shape == (seq_len, batch, num_outputs)
    assert hn.shape == (1, batch, hidden_features)
    assert cn.shape == (1, batch, hidden_features)
    assert jnp.allclose(out, ro, atol=1e-5), "out mismatch"
    assert jnp.allclose(hn, rh, atol=1e-5), "hn mismatch"
    assert jnp.allclose(cn, rc, atol=1e-5), "cn mismatch"

    print("KERNEL_OK")
</pallas_src>

<mosaic_0001>
module attributes {stable_mosaic.version = 11 : i64} {
  func.func @lstm_kernel(%arg0: i32, %arg1: memref<64x4xf32, #tpu.memory_space<vmem>>, %arg2: memref<4x128xf32, #tpu.memory_space<vmem>>, %arg3: memref<32x128xf32, #tpu.memory_space<vmem>>, %arg4: memref<1x128xf32, #tpu.memory_space<vmem>>, %arg5: memref<1x32xf32, #tpu.memory_space<vmem>>, %arg6: memref<1x1xf32, #tpu.memory_space<vmem>>, %arg7: memref<64x1xf32, #tpu.memory_space<vmem>>, %arg8: memref<2x32xf32, #tpu.memory_space<vmem>>, %arg9: memref<2x32xf32, #tpu.memory_space<vmem>>, %arg10: memref<64x128xf32, #tpu.memory_space<vmem>>, %arg11: memref<64x32xf32, #tpu.memory_space<vmem>>) attributes {dimension_semantics = [#tpu.dimension_semantics<arbitrary>], iteration_bounds = array<i64: 1>, scalar_prefetch = 0 : i64, scratch_operands = 2 : i64, tpu.core_type = #tpu.core_type<tc>, window_params = [{pipeline_mode = #tpu.pipeline_mode<synchronous>, transform_indices = @transform_0, window_bounds = array<i64: 64, 4>}, {pipeline_mode = #tpu.pipeline_mode<synchronous>, transform_indices = @transform_1, window_bounds = array<i64: 4, 128>}, {pipeline_mode = #tpu.pipeline_mode<synchronous>, transform_indices = @transform_2, window_bounds = array<i64: 32, 128>}, {pipeline_mode = #tpu.pipeline_mode<synchronous>, transform_indices = @transform_3, window_bounds = array<i64: 1, 128>}, {pipeline_mode = #tpu.pipeline_mode<synchronous>, transform_indices = @transform_4, window_bounds = array<i64: 1, 32>}, {pipeline_mode = #tpu.pipeline_mode<synchronous>, transform_indices = @transform_5, window_bounds = array<i64: 1, 1>}, {pipeline_mode = #tpu.pipeline_mode<synchronous>, transform_indices = @transform_6, window_bounds = array<i64: 64, 1>}, {pipeline_mode = #tpu.pipeline_mode<synchronous>, transform_indices = @transform_7, window_bounds = array<i64: 2, 32>}, {pipeline_mode = #tpu.pipeline_mode<synchronous>, transform_indices = @transform_8, window_bounds = array<i64: 2, 32>}]} {
    %c0 = arith.constant 0 : index
    %c0_0 = arith.constant 0 : index
    %0 = vector.load %arg1[%c0, %c0_0] : memref<64x4xf32, #tpu.memory_space<vmem>>, vector<64x4xf32>
    %c0_1 = arith.constant 0 : index
    %c0_2 = arith.constant 0 : index
    %1 = vector.load %arg2[%c0_1, %c0_2] : memref<4x128xf32, #tpu.memory_space<vmem>>, vector<4x128xf32>
    %cst = arith.constant dense<0.000000e+00> : vector<64x128xf32>
    %2 = tpu.matmul %0, %1, %cst {dimension_numbers = #tpu.dot_dimension_numbers<[1], [0], [0], [1], [0, 0, 1, 1], [], []>} : vector<64x4xf32>, vector<4x128xf32>, vector<64x128xf32> -> vector<64x128xf32>
    %c0_3 = arith.constant 0 : index
    %c0_4 = arith.constant 0 : index
    %3 = vector.load %arg4[%c0_3, %c0_4] : memref<1x128xf32, #tpu.memory_space<vmem>>, vector<1x128xf32>
    %4 = vector.broadcast %3 : vector<1x128xf32> to vector<64x128xf32>
    %5 = arith.addf %2, %4 : vector<64x128xf32>
    %c0_5 = arith.constant 0 : index
    %c0_6 = arith.constant 0 : index
    %6 = vector.load %arg10[%c0_5, %c0_6] : memref<64x128xf32, #tpu.memory_space<vmem>>, vector<64x128xf32>
    tpu.vector_store %arg10[%c0_5, %c0_6], %5 {strides = array<i32>} : memref<64x128xf32, #tpu.memory_space<vmem>>, vector<64x128xf32>,
    %c0_7 = arith.constant 0 : index
    %c0_8 = arith.constant 0 : index
    %7 = vector.load %arg3[%c0_7, %c0_8] : memref<32x128xf32, #tpu.memory_space<vmem>>, vector<32x128xf32>
    %8 = tpu.iota {dimensions = array<i32: 1>} : vector<8x128xi32>
    %c64_i32 = arith.constant 64 : i32
    %9 = vector.broadcast %c64_i32 : i32 to vector<8x128xi32>
    %10 = arith.cmpi sge, %8, %9 : vector<8x128xi32>
    %c96_i32 = arith.constant 96 : i32
    %11 = vector.broadcast %c96_i32 : i32 to vector<8x128xi32>
    %12 = arith.cmpi slt, %8, %11 : vector<8x128xi32>
    %13 = arith.andi %10, %12 : vector<8x128xi1>
    %cst_9 = arith.constant 0.000000e+00 : f32
    %14 = vector.broadcast %cst_9 : f32 to vector<8x32xf32>
    %c0_i32 = arith.constant 0 : i32
    %c8_i32 = arith.constant 8 : i32
    %15 = arith.muli %c0_i32, %c8_i32 : i32
    %16 = tpu.assume_multiple %15, 8 : i32
    %17 = arith.index_cast %16 : i32 to index
    %c0_10 = arith.constant 0 : index
    %18 = vector.load %arg10[%17, %c0_10] : memref<64x128xf32, #tpu.memory_space<vmem>>, vector<8x128xf32>
    %cst_11 = arith.constant dense<0.000000e+00> : vector<8x128xf32>
    %19 = tpu.matmul %14, %7, %cst_11 {dimension_numbers = #tpu.dot_dimension_numbers<[1], [0], [0], [1], [0, 0, 1, 1], [], []>} : vector<8x32xf32>, vector<32x128xf32>, vector<8x128xf32> -> vector<8x128xf32>
    %20 = arith.addf %18, %19 : vector<8x128xf32>
    %21 = math.tanh %20 : vector<8x128xf32>
    %22 = arith.negf %20 : vector<8x128xf32>
    %23 = math.exp %22 : vector<8x128xf32>
    %cst_12 = arith.constant 1.000000e+00 : f32
    %24 = vector.broadcast %cst_12 : f32 to vector<8x128xf32>
    %25 = arith.addf %24, %23 : vector<8x128xf32>
    %26 = arith.divf %24, %25 : vector<8x128xf32>
    %27 = arith.select %13, %21, %26 : vector<8x128xi1>, vector<8x128xf32>
    %28 = vector.extract_strided_slice %27 {offsets = [0, 0], sizes = [8, 32], strides = [1, 1]} : vector<8x128xf32> to vector<8x32xf32>
    %29 = vector.extract_strided_slice %27 {offsets = [0, 32], sizes = [8, 32], strides = [1, 1]} : vector<8x128xf32> to vector<8x32xf32>
    %30 = vector.extract_strided_slice %27 {offsets = [0, 64], sizes = [8, 32], strides = [1, 1]} : vector<8x128xf32> to vector<8x32xf32>
    %31 = vector.extract_strided_slice %27 {offsets = [0, 96], sizes = [8, 32], strides = [1, 1]} : vector<8x128xf32> to vector<8x32xf32>
    %32 = arith.mulf %29, %14 : vector<8x32xf32>
    %33 = arith.mulf %28, %30 : vector<8x32xf32>
    %34 = arith.addf %32, %33 : vector<8x32xf32>
    %35 = math.tanh %34 : vector<8x32xf32>
    %36 = arith.mulf %31, %35 : vector<8x32xf32>
    %37 = arith.index_cast %16 : i32 to index
    %c0_13 = arith.constant 0 : index
    %38 = vector.load %arg11[%37, %c0_13] : memref<64x32xf32, #tpu.memory_space<vmem>>, vector<8x32xf32>
    tpu.vector_store %arg11[%37, %c0_13], %36 {strides = array<i32>} : memref<64x32xf32, #tpu.memory_space<vmem>>, vector<8x32xf32>,
    %c1_i32 = arith.constant 1 : i32
    %c8_i32_14 = arith.constant 8 : i32
    %39 = arith.muli %c1_i32, %c8_i32_14 : i32
    %40 = tpu.assume_multiple %39, 8 : i32
    %41 = arith.index_cast %40 : i32 to index
    %c0_15 = arith.constant 0 : index
    %42 = vector.load %arg10[%41, %c0_15] : memref<64x128xf32, #tpu.memory_space<vmem>>, vector<8x128xf32>
    %cst_16 = arith.constant dense<0.000000e+00> : vector<8x128xf32>
    %43 = tpu.matmul %36, %7, %cst_16 {dimension_numbers = #tpu.dot_dimension_numbers<[1], [0], [0], [1], [0, 0, 1, 1], [], []>} : vector<8x32xf32>, vector<32x128xf32>, vector<8x128xf32> -> vector<8x128xf32>
    %44 = arith.addf %42, %43 : vector<8x128xf32>
    %45 = math.tanh %44 : vector<8x128xf32>
    %46 = arith.negf %44 : vector<8x128xf32>
    %47 = math.exp %46 : vector<8x128xf32>
    %cst_17 = arith.constant 1.000000e+00 : f32
    %48 = vector.broadcast %cst_17 : f32 to vector<8x128xf32>
    %49 = arith.addf %48, %47 : vector<8x128xf32>
    %50 = arith.divf %48, %49 : vector<8x128xf32>
    %51 = arith.select %13, %45, %50 : vector<8x128xi1>, vector<8x128xf32>
    %52 = vector.extract_strided_slice %51 {offsets = [0, 0], sizes = [8, 32], strides = [1, 1]} : vector<8x128xf32> to vector<8x32xf32>
    %53 = vector.extract_strided_slice %51 {offsets = [0, 32], sizes = [8, 32], strides = [1, 1]} : vector<8x128xf32> to vector<8x32xf32>
    %54 = vector.extract_strided_slice %51 {offsets = [0, 64], sizes = [8, 32], strides = [1, 1]} : vector<8x128xf32> to vector<8x32xf32>
    %55 = vector.extract_strided_slice %51 {offsets = [0, 96], sizes = [8, 32], strides = [1, 1]} : vector<8x128xf32> to vector<8x32xf32>
    %56 = arith.mulf %53, %34 : vector<8x32xf32>
    %57 = arith.mulf %52, %54 : vector<8x32xf32>
    %58 = arith.addf %56, %57 : vector<8x32xf32>
    %59 = math.tanh %58 : vector<8x32xf32>
    %60 = arith.mulf %55, %59 : vector<8x32xf32>
    %61 = arith.index_cast %40 : i32 to index
    %c0_18 = arith.constant 0 : index
    %62 = vector.load %arg11[%61, %c0_18] : memref<64x32xf32, #tpu.memory_space<vmem>>, vector<8x32xf32>
    tpu.vector_store %arg11[%61, %c0_18], %60 {strides = array<i32>} : memref<64x32xf32, #tpu.memory_space<vmem>>, vector<8x32xf32>,
    %c2_i32 = arith.constant 2 : i32
    %c8_i32_19 = arith.constant 8 : i32
    %63 = arith.muli %c2_i32, %c8_i32_19 : i32
    %64 = tpu.assume_multiple %63, 8 : i32
    %65 = arith.index_cast %64 : i32 to index
    %c0_20 = arith.constant 0 : index
    %66 = vector.load %arg10[%65, %c0_20] : memref<64x128xf32, #tpu.memory_space<vmem>>, vector<8x128xf32>
    %cst_21 = arith.constant dense<0.000000e+00> : vector<8x128xf32>
    %67 = tpu.matmul %60, %7, %cst_21 {dimension_numbers = #tpu.dot_dimension_numbers<[1], [0], [0], [1], [0, 0, 1, 1], [], []>} : vector<8x32xf32>, vector<32x128xf32>, vector<8x128xf32> -> vector<8x128xf32>
    %68 = arith.addf %66, %67 : vector<8x128xf32>
    %69 = math.tanh %68 : vector<8x128xf32>
    %70 = arith.negf %68 : vector<8x128xf32>
    %71 = math.exp %70 : vector<8x128xf32>
    %cst_22 = arith.constant 1.000000e+00 : f32
    %72 = vector.broadcast %cst_22 : f32 to vector<8x128xf32>
    %73 = arith.addf %72, %71 : vector<8x128xf32>
    %74 = arith.divf %72, %73 : vector<8x128xf32>
    %75 = arith.select %13, %69, %74 : vector<8x128xi1>, vector<8x128xf32>
    %76 = vector.extract_strided_slice %75 {offsets = [0, 0], sizes = [8, 32], strides = [1, 1]} : vector<8x128xf32> to vector<8x32xf32>
    %77 = vector.extract_strided_slice %75 {offsets = [0, 32], sizes = [8, 32], strides = [1, 1]} : vector<8x128xf32> to vector<8x32xf32>
    %78 = vector.extract_strided_slice %75 {offsets = [0, 64], sizes = [8, 32], strides = [1, 1]} : vector<8x128xf32> to vector<8x32xf32>
    %79 = vector.extract_strided_slice %75 {offsets = [0, 96], sizes = [8, 32], strides = [1, 1]} : vector<8x128xf32> to vector<8x32xf32>
    %80 = arith.mulf %77, %58 : vector<8x32xf32>
    %81 = arith.mulf %76, %78 : vector<8x32xf32>
    %82 = arith.addf %80, %81 : vector<8x32xf32>
    %83 = math.tanh %82 : vector<8x32xf32>
    %84 = arith.mulf %79, %83 : vector<8x32xf32>
    %85 = arith.index_cast %64 : i32 to index
    %c0_23 = arith.constant 0 : index
    %86 = vector.load %arg11[%85, %c0_23] : memref<64x32xf32, #tpu.memory_space<vmem>>, vector<8x32xf32>
    tpu.vector_store %arg11[%85, %c0_23], %84 {strides = array<i32>} : memref<64x32xf32, #tpu.memory_space<vmem>>, vector<8x32xf32>,
    %c3_i32 = arith.constant 3 : i32
    %c8_i32_24 = arith.constant 8 : i32
    %87 = arith.muli %c3_i32, %c8_i32_24 : i32
    %88 = tpu.assume_multiple %87, 8 : i32
    %89 = arith.index_cast %88 : i32 to index
    %c0_25 = arith.constant 0 : index
    %90 = vector.load %arg10[%89, %c0_25] : memref<64x128xf32, #tpu.memory_space<vmem>>, vector<8x128xf32>
    %cst_26 = arith.constant dense<0.000000e+00> : vector<8x128xf32>
    %91 = tpu.matmul %84, %7, %cst_26 {dimension_numbers = #tpu.dot_dimension_numbers<[1], [0], [0], [1], [0, 0, 1, 1], [], []>} : vector<8x32xf32>, vector<32x128xf32>, vector<8x128xf32> -> vector<8x128xf32>
    %92 = arith.addf %90, %91 : vector<8x128xf32>
    %93 = math.tanh %92 : vector<8x128xf32>
    %94 = arith.negf %92 : vector<8x128xf32>
    %95 = math.exp %94 : vector<8x128xf32>
    %cst_27 = arith.constant 1.000000e+00 : f32
    %96 = vector.broadcast %cst_27 : f32 to vector<8x128xf32>
    %97 = arith.addf %96, %95 : vector<8x128xf32>
    %98 = arith.divf %96, %97 : vector<8x128xf32>
    %99 = arith.select %13, %93, %98 : vector<8x128xi1>, vector<8x128xf32>
    %100 = vector.extract_strided_slice %99 {offsets = [0, 0], sizes = [8, 32], strides = [1, 1]} : vector<8x128xf32> to vector<8x32xf32>
    %101 = vector.extract_strided_slice %99 {offsets = [0, 32], sizes = [8, 32], strides = [1, 1]} : vector<8x128xf32> to vector<8x32xf32>
    %102 = vector.extract_strided_slice %99 {offsets = [0, 64], sizes = [8, 32], strides = [1, 1]} : vector<8x128xf32> to vector<8x32xf32>
    %103 = vector.extract_strided_slice %99 {offsets = [0, 96], sizes = [8, 32], strides = [1, 1]} : vector<8x128xf32> to vector<8x32xf32>
    %104 = arith.mulf %101, %82 : vector<8x32xf32>
    %105 = arith.mulf %100, %102 : vector<8x32xf32>
    %106 = arith.addf %104, %105 : vector<8x32xf32>
    %107 = math.tanh %106 : vector<8x32xf32>
    %108 = arith.mulf %103, %107 : vector<8x32xf32>
    %109 = arith.index_cast %88 : i32 to index
    %c0_28 = arith.constant 0 : index
    %110 = vector.load %arg11[%109, %c0_28] : memref<64x32xf32, #tpu.memory_space<vmem>>, vector<8x32xf32>
    tpu.vector_store %arg11[%109, %c0_28], %108 {strides = array<i32>} : memref<64x32xf32, #tpu.memory_space<vmem>>, vector<8x32xf32>,
    %c4_i32 = arith.constant 4 : i32
    %c8_i32_29 = arith.constant 8 : i32
    %111 = arith.muli %c4_i32, %c8_i32_29 : i32
    %112 = tpu.assume_multiple %111, 8 : i32
    %113 = arith.index_cast %112 : i32 to index
    %c0_30 = arith.constant 0 : index
    %114 = vector.load %arg10[%113, %c0_30] : memref<64x128xf32, #tpu.memory_space<vmem>>, vector<8x128xf32>
    %cst_31 = arith.constant dense<0.000000e+00> : vector<8x128xf32>
    %115 = tpu.matmul %108, %7, %cst_31 {dimension_numbers = #tpu.dot_dimension_numbers<[1], [0], [0], [1], [0, 0, 1, 1], [], []>} : vector<8x32xf32>, vector<32x128xf32>, vector<8x128xf32> -> vector<8x128xf32>
    %116 = arith.addf %114, %115 : vector<8x128xf32>
    %117 = math.tanh %116 : vector<8x128xf32>
    %118 = arith.negf %116 : vector<8x128xf32>
    %119 = math.exp %118 : vector<8x128xf32>
    %cst_32 = arith.constant 1.000000e+00 : f32
    %120 = vector.broadcast %cst_32 : f32 to vector<8x128xf32>
    %121 = arith.addf %120, %119 : vector<8x128xf32>
    %122 = arith.divf %120, %121 : vector<8x128xf32>
    %123 = arith.select %13, %117, %122 : vector<8x128xi1>, vector<8x128xf32>
    %124 = vector.extract_strided_slice %123 {offsets = [0, 0], sizes = [8, 32], strides = [1, 1]} : vector<8x128xf32> to vector<8x32xf32>
    %125 = vector.extract_strided_slice %123 {offsets = [0, 32], sizes = [8, 32], strides = [1, 1]} : vector<8x128xf32> to vector<8x32xf32>
    %126 = vector.extract_strided_slice %123 {offsets = [0, 64], sizes = [8, 32], strides = [1, 1]} : vector<8x128xf32> to vector<8x32xf32>
    %127 = vector.extract_strided_slice %123 {offsets = [0, 96], sizes = [8, 32], strides = [1, 1]} : vector<8x128xf32> to vector<8x32xf32>
    %128 = arith.mulf %125, %106 : vector<8x32xf32>
    %129 = arith.mulf %124, %126 : vector<8x32xf32>
    %130 = arith.addf %128, %129 : vector<8x32xf32>
    %131 = math.tanh %130 : vector<8x32xf32>
    %132 = arith.mulf %127, %131 : vector<8x32xf32>
    %133 = arith.index_cast %112 : i32 to index
    %c0_33 = arith.constant 0 : index
    %134 = vector.load %arg11[%133, %c0_33] : memref<64x32xf32, #tpu.memory_space<vmem>>, vector<8x32xf32>
    tpu.vector_store %arg11[%133, %c0_33], %132 {strides = array<i32>} : memref<64x32xf32, #tpu.memory_space<vmem>>, vector<8x32xf32>,
    %c5_i32 = arith.constant 5 : i32
    %c8_i32_34 = arith.constant 8 : i32
    %135 = arith.muli %c5_i32, %c8_i32_34 : i32
    %136 = tpu.assume_multiple %135, 8 : i32
    %137 = arith.index_cast %136 : i32 to index
    %c0_35 = arith.constant 0 : index
    %138 = vector.load %arg10[%137, %c0_35] : memref<64x128xf32, #tpu.memory_space<vmem>>, vector<8x128xf32>
    %cst_36 = arith.constant dense<0.000000e+00> : vector<8x128xf32>
    %139 = tpu.matmul %132, %7, %cst_36 {dimension_numbers = #tpu.dot_dimension_numbers<[1], [0], [0], [1], [0, 0, 1, 1], [], []>} : vector<8x32xf32>, vector<32x128xf32>, vector<8x128xf32> -> vector<8x128xf32>
    %140 = arith.addf %138, %139 : vector<8x128xf32>
    %141 = math.tanh %140 : vector<8x128xf32>
    %142 = arith.negf %140 : vector<8x128xf32>
    %143 = math.exp %142 : vector<8x128xf32>
    %cst_37 = arith.constant 1.000000e+00 : f32
    %144 = vector.broadcast %cst_37 : f32 to vector<8x128xf32>
    %145 = arith.addf %144, %143 : vector<8x128xf32>
    %146 = arith.divf %144, %145 : vector<8x128xf32>
    %147 = arith.select %13, %141, %146 : vector<8x128xi1>, vector<8x128xf32>
    %148 = vector.extract_strided_slice %147 {offsets = [0, 0], sizes = [8, 32], strides = [1, 1]} : vector<8x128xf32> to vector<8x32xf32>
    %149 = vector.extract_strided_slice %147 {offsets = [0, 32], sizes = [8, 32], strides = [1, 1]} : vector<8x128xf32> to vector<8x32xf32>
    %150 = vector.extract_strided_slice %147 {offsets = [0, 64], sizes = [8, 32], strides = [1, 1]} : vector<8x128xf32> to vector<8x32xf32>
    %151 = vector.extract_strided_slice %147 {offsets = [0, 96], sizes = [8, 32], strides = [1, 1]} : vector<8x128xf32> to vector<8x32xf32>
    %152 = arith.mulf %149, %130 : vector<8x32xf32>
    %153 = arith.mulf %148, %150 : vector<8x32xf32>
    %154 = arith.addf %152, %153 : vector<8x32xf32>
    %155 = math.tanh %154 : vector<8x32xf32>
    %156 = arith.mulf %151, %155 : vector<8x32xf32>
    %157 = arith.index_cast %136 : i32 to index
    %c0_38 = arith.constant 0 : index
    %158 = vector.load %arg11[%157, %c0_38] : memref<64x32xf32, #tpu.memory_space<vmem>>, vector<8x32xf32>
    tpu.vector_store %arg11[%157, %c0_38], %156 {strides = array<i32>} : memref<64x32xf32, #tpu.memory_space<vmem>>, vector<8x32xf32>,
    %c6_i32 = arith.constant 6 : i32
    %c8_i32_39 = arith.constant 8 : i32
    %159 = arith.muli %c6_i32, %c8_i32_39 : i32
    %160 = tpu.assume_multiple %159, 8 : i32
    %161 = arith.index_cast %160 : i32 to index
    %c0_40 = arith.constant 0 : index
    %162 = vector.load %arg10[%161, %c0_40] : memref<64x128xf32, #tpu.memory_space<vmem>>, vector<8x128xf32>
    %cst_41 = arith.constant dense<0.000000e+00> : vector<8x128xf32>
    %163 = tpu.matmul %156, %7, %cst_41 {dimension_numbers = #tpu.dot_dimension_numbers<[1], [0], [0], [1], [0, 0, 1, 1], [], []>} : vector<8x32xf32>, vector<32x128xf32>, vector<8x128xf32> -> vector<8x128xf32>
    %164 = arith.addf %162, %163 : vector<8x128xf32>
    %165 = math.tanh %164 : vector<8x128xf32>
    %166 = arith.negf %164 : vector<8x128xf32>
    %167 = math.exp %166 : vector<8x128xf32>
    %cst_42 = arith.constant 1.000000e+00 : f32
    %168 = vector.broadcast %cst_42 : f32 to vector<8x128xf32>
    %169 = arith.addf %168, %167 : vector<8x128xf32>
    %170 = arith.divf %168, %169 : vector<8x128xf32>
    %171 = arith.select %13, %165, %170 : vector<8x128xi1>, vector<8x128xf32>
    %172 = vector.extract_strided_slice %171 {offsets = [0, 0], sizes = [8, 32], strides = [1, 1]} : vector<8x128xf32> to vector<8x32xf32>
    %173 = vector.extract_strided_slice %171 {offsets = [0, 32], sizes = [8, 32], strides = [1, 1]} : vector<8x128xf32> to vector<8x32xf32>
    %174 = vector.extract_strided_slice %171 {offsets = [0, 64], sizes = [8, 32], strides = [1, 1]} : vector<8x128xf32> to vector<8x32xf32>
    %175 = vector.extract_strided_slice %171 {offsets = [0, 96], sizes = [8, 32], strides = [1, 1]} : vector<8x128xf32> to vector<8x32xf32>
    %176 = arith.mulf %173, %154 : vector<8x32xf32>
    %177 = arith.mulf %172, %174 : vector<8x32xf32>
    %178 = arith.addf %176, %177 : vector<8x32xf32>
    %179 = math.tanh %178 : vector<8x32xf32>
    %180 = arith.mulf %175, %179 : vector<8x32xf32>
    %181 = arith.index_cast %160 : i32 to index
    %c0_43 = arith.constant 0 : index
    %182 = vector.load %arg11[%181, %c0_43] : memref<64x32xf32, #tpu.memory_space<vmem>>, vector<8x32xf32>
    tpu.vector_store %arg11[%181, %c0_43], %180 {strides = array<i32>} : memref<64x32xf32, #tpu.memory_space<vmem>>, vector<8x32xf32>,
    %c7_i32 = arith.constant 7 : i32
    %c8_i32_44 = arith.constant 8 : i32
    %183 = arith.muli %c7_i32, %c8_i32_44 : i32
    %184 = tpu.assume_multiple %183, 8 : i32
    %185 = arith.index_cast %184 : i32 to index
    %c0_45 = arith.constant 0 : index
    %186 = vector.load %arg10[%185, %c0_45] : memref<64x128xf32, #tpu.memory_space<vmem>>, vector<8x128xf32>
    %cst_46 = arith.constant dense<0.000000e+00> : vector<8x128xf32>
    %187 = tpu.matmul %180, %7, %cst_46 {dimension_numbers = #tpu.dot_dimension_numbers<[1], [0], [0], [1], [0, 0, 1, 1], [], []>} : vector<8x32xf32>, vector<32x128xf32>, vector<8x128xf32> -> vector<8x128xf32>
    %188 = arith.addf %186, %187 : vector<8x128xf32>
    %189 = math.tanh %188 : vector<8x128xf32>
    %190 = arith.negf %188 : vector<8x128xf32>
    %191 = math.exp %190 : vector<8x128xf32>
    %cst_47 = arith.constant 1.000000e+00 : f32
    %192 = vector.broadcast %cst_47 : f32 to vector<8x128xf32>
    %193 = arith.addf %192, %191 : vector<8x128xf32>
    %194 = arith.divf %192, %193 : vector<8x128xf32>
    %195 = arith.select %13, %189, %194 : vector<8x128xi1>, vector<8x128xf32>
    %196 = vector.extract_strided_slice %195 {offsets = [0, 0], sizes = [8, 32], strides = [1, 1]} : vector<8x128xf32> to vector<8x32xf32>
    %197 = vector.extract_strided_slice %195 {offsets = [0, 32], sizes = [8, 32], strides = [1, 1]} : vector<8x128xf32> to vector<8x32xf32>
    %198 = vector.extract_strided_slice %195 {offsets = [0, 64], sizes = [8, 32], strides = [1, 1]} : vector<8x128xf32> to vector<8x32xf32>
    %199 = vector.extract_strided_slice %195 {offsets = [0, 96], sizes = [8, 32], strides = [1, 1]} : vector<8x128xf32> to vector<8x32xf32>
    %200 = arith.mulf %197, %178 : vector<8x32xf32>
    %201 = arith.mulf %196, %198 : vector<8x32xf32>
    %202 = arith.addf %200, %201 : vector<8x32xf32>
    %203 = math.tanh %202 : vector<8x32xf32>
    %204 = arith.mulf %199, %203 : vector<8x32xf32>
    %205 = arith.index_cast %184 : i32 to index
    %c0_48 = arith.constant 0 : index
    %206 = vector.load %arg11[%205, %c0_48] : memref<64x32xf32, #tpu.memory_space<vmem>>, vector<8x32xf32>
    tpu.vector_store %arg11[%205, %c0_48], %204 {strides = array<i32>} : memref<64x32xf32, #tpu.memory_space<vmem>>, vector<8x32xf32>,
    %c8_i32_49 = arith.constant 8 : i32
    %c0_50 = arith.constant 0 : index
    %c0_51 = arith.constant 0 : index
    %207 = vector.load %arg11[%c0_50, %c0_51] : memref<64x32xf32, #tpu.memory_space<vmem>>, vector<64x32xf32>
    %c0_52 = arith.constant 0 : index
    %c0_53 = arith.constant 0 : index
    %208 = vector.load %arg5[%c0_52, %c0_53] : memref<1x32xf32, #tpu.memory_space<vmem>>, vector<1x32xf32>
    %209 = vector.broadcast %208 : vector<1x32xf32> to vector<64x32xf32>
    %210 = arith.mulf %207, %209 : vector<64x32xf32>
    %cst_54 = arith.constant dense<0.000000e+00> : vector<64xf32>
    %211 = vector.multi_reduction <add>, %210, %cst_54 [1] : vector<64x32xf32> to vector<64xf32>
    %212 = vector.shape_cast %211 : vector<64xf32> to vector<64x1xf32>
    %c0_55 = arith.constant 0 : index
    %c0_56 = arith.constant 0 : index
    %213 = vector.load %arg6[%c0_55, %c0_56] : memref<1x1xf32, #tpu.memory_space<vmem>>, vector<1x1xf32>
    %214 = vector.broadcast %213 : vector<1x1xf32> to vector<64x1xf32>
    %215 = arith.addf %212, %214 : vector<64x1xf32>
    %c0_57 = arith.constant 0 : index
    %c0_58 = arith.constant 0 : index
    %216 = vector.load %arg7[%c0_57, %c0_58] : memref<64x1xf32, #tpu.memory_space<vmem>>, vector<64x1xf32>
    tpu.vector_store %arg7[%c0_57, %c0_58], %215 {strides = array<i32>} : memref<64x1xf32, #tpu.memory_space<vmem>>, vector<64x1xf32>,
    %217 = vector.extract_strided_slice %204 {offsets = [0, 0], sizes = [2, 32], strides = [1, 1]} : vector<8x32xf32> to vector<2x32xf32>
    %c0_59 = arith.constant 0 : index
    %c0_60 = arith.constant 0 : index
    %218 = vector.load %arg8[%c0_59, %c0_60] : memref<2x32xf32, #tpu.memory_space<vmem>>, vector<2x32xf32>
    tpu.vector_store %arg8[%c0_59, %c0_60], %217 {strides = array<i32>} : memref<2x32xf32, #tpu.memory_space<vmem>>, vector<2x32xf32>,
    %219 = vector.extract_strided_slice %202 {offsets = [0, 0], sizes = [2, 32], strides = [1, 1]} : vector<8x32xf32> to vector<2x32xf32>
    %c0_61 = arith.constant 0 : index
    %c0_62 = arith.constant 0 : index
    %220 = vector.load %arg9[%c0_61, %c0_62] : memref<2x32xf32, #tpu.memory_space<vmem>>, vector<2x32xf32>
    tpu.vector_store %arg9[%c0_61, %c0_62], %219 {strides = array<i32>} : memref<2x32xf32, #tpu.memory_space<vmem>>, vector<2x32xf32>,
    return
  }
  func.func @transform_0(%arg0: i32) -> (i32, i32) {
    %c0_i32 = arith.constant 0 : i32
    %c0_i32_0 = arith.constant 0 : i32
    %c0_i32_1 = arith.constant 0 : i32
    return %c0_i32, %c0_i32_0 : i32, i32
  }
  func.func @transform_1(%arg0: i32) -> (i32, i32) {
    %c0_i32 = arith.constant 0 : i32
    %c0_i32_0 = arith.constant 0 : i32
    %c0_i32_1 = arith.constant 0 : i32
    return %c0_i32, %c0_i32_0 : i32, i32
  }
  func.func @transform_2(%arg0: i32) -> (i32, i32) {
    %c0_i32 = arith.constant 0 : i32
    %c0_i32_0 = arith.constant 0 : i32
    %c0_i32_1 = arith.constant 0 : i32
    return %c0_i32, %c0_i32_0 : i32, i32
  }
  func.func @transform_3(%arg0: i32) -> (i32, i32) {
    %c0_i32 = arith.constant 0 : i32
    %c0_i32_0 = arith.constant 0 : i32
    %c0_i32_1 = arith.constant 0 : i32
    return %c0_i32, %c0_i32_0 : i32, i32
  }
  func.func @transform_4(%arg0: i32) -> (i32, i32) {
    %c0_i32 = arith.constant 0 : i32
    %c0_i32_0 = arith.constant 0 : i32
    %c0_i32_1 = arith.constant 0 : i32
    return %c0_i32, %c0_i32_0 : i32, i32
  }
  func.func @transform_5(%arg0: i32) -> (i32, i32) {
    %c0_i32 = arith.constant 0 : i32
    %c0_i32_0 = arith.constant 0 : i32
    %c0_i32_1 = arith.constant 0 : i32
    return %c0_i32, %c0_i32_0 : i32, i32
  }
  func.func @transform_6(%arg0: i32) -> (i32, i32) {
    %c0_i32 = arith.constant 0 : i32
    %c0_i32_0 = arith.constant 0 : i32
    %c0_i32_1 = arith.constant 0 : i32
    return %c0_i32, %c0_i32_0 : i32, i32
  }
  func.func @transform_7(%arg0: i32) -> (i32, i32) {
    %c0_i32 = arith.constant 0 : i32
    %c0_i32_0 = arith.constant 0 : i32
    %c0_i32_1 = arith.constant 0 : i32
    return %c0_i32, %c0_i32_0 : i32, i32
  }
  func.func @transform_8(%arg0: i32) -> (i32, i32) {
    %c0_i32 = arith.constant 0 : i32
    %c0_i32_0 = arith.constant 0 : i32
    %c0_i32_1 = arith.constant 0 : i32
    return %c0_i32, %c0_i32_0 : i32, i32
  }
}

</mosaic_0001>

<llo_original>
// kernel: lstm_rnn_forward.1
$region0: #{lstm_rnn_forward.1}
  #allocation0 [shape = 'u32[]', space=smem, size = 0x4, offset = 0x4, fixed_abs, tag = 'smem constant byte address 0x4 - core index']
  #allocation1 [shape = 'u32[72,128]{1,0:T(1,128)}', space=vmem, size = 0x9000, scoped, tag = 'internal scratch']
  #allocation2 [shape = 'f32[64,128]{1,0:T(8,128)}', space=vmem, size = 0x8000, scoped, tag = 'scratch operand']
  #allocation3 [shape = 'f32[64,32]{1,0:T(8,128)}', space=vmem, size = 0x8000, scoped, tag = 'scratch operand']
  #allocation4 [shape = 'f32[1,1]{1,0:T(1,128)S(1)}', space=vmem, size = 0x200, scoped, tag = 'scoped memory for lstm_rnn_forward.1']
  %s0 = inlined_call_operand.vmem [shape: f32[64,4], index: 0, kind: input, shape index: {}]
  %s1 = inlined_call_operand.vmem [shape: f32[4,128], index: 1, kind: input, shape index: {}]
  %s2 = inlined_call_operand.vmem [shape: f32[32,128], index: 2, kind: input, shape index: {}]
  %s3 = inlined_call_operand.vmem [shape: f32[1,128], index: 3, kind: input, shape index: {}]
  %s4 = inlined_call_operand.vmem [shape: f32[1,32], index: 4, kind: input, shape index: {}]
  %s5 = inlined_call_operand.<no memory space> [shape: f32[1,1], index: 5, kind: input, shape index: {}]
  %s6 = inlined_call_operand.vmem [shape: f32[64,1], index: 6, kind: output, shape index: {0}]
  %s7 = inlined_call_operand.hbm [shape: f32[2,32], index: 7, kind: output, shape index: {1}]
  %s8 = inlined_call_operand.hbm [shape: f32[2,32], index: 8, kind: output, shape index: {2}]
  %9 = xla_tuple %s6, %s7, %s8
  %s10 = sld [smem:[#allocation0]]
  $region50: #{lstm_rnn_forward.1} parent=0
    _
  %s12 = ssub.s32 1, %s10
  %s13 = scalar_select 0, %s12, %s10
  %v14 = vstv %s5
  %15 = vst [vmem:[#allocation4] sm:$0x1] %v14
  $region1: #{lstm_rnn_forward.1} parent=0
    #allocation5 [shape = 'u8[1024]{0}', space=vmem, size = 0x400, scoped, tag = 'output window, operand 1, single buffered']
    #allocation6 [shape = 's32[1]{0}', space=sflag, size = 0x4, scoped, tag = 'scoped memory for lstm_rnn_forward.1']
    #allocation7 [shape = 'u8[1024]{0}', space=vmem, size = 0x400, scoped, tag = 'output window, operand 2, single buffered']
    #allocation8 [shape = 's32[1]{0}', space=sflag, size = 0x4, scoped, tag = 'scoped memory for lstm_rnn_forward.1']
    %16 = vsyncpa [#allocation6], 0
    %17 = vsyncpa [#allocation8], 0
    // Predicated region
    $region2: #{lstm_rnn_forward.1} parent=1 // pred_check
      _
    $region3: #{lstm_rnn_forward.1} parent=1 // pred_check_branch
      %19 = sbr.rel (0) target = $region5
    $region4: #{lstm_rnn_forward.1} parent=1 // pred_region
      _
    $region5: #{lstm_rnn_forward.1} parent=1 // pred_fallthru
      _
    // Predicated region
    $region6: #{lstm_rnn_forward.1} parent=1 // pred_check
      _
    $region7: #{lstm_rnn_forward.1} parent=1 // pred_check_branch
      %21 = sbr.rel (0) target = $region9
    $region8: #{lstm_rnn_forward.1} parent=1 // pred_region
      _
    $region9: #{lstm_rnn_forward.1} parent=1 // pred_fallthru
      _
    // Predicated region
    $region10: #{lstm_rnn_forward.1} parent=1 // pred_check
      _
    $region11: #{lstm_rnn_forward.1} parent=1 // pred_check_branch
      %23 = sbr.rel (0) target = $region13
    $region12: #{lstm_rnn_forward.1} parent=1 // pred_region
      _
    $region13: #{lstm_rnn_forward.1} parent=1 // pred_fallthru
      _
    // Predicated region
    $region14: #{lstm_rnn_forward.1} parent=1 // pred_check
      _
    $region15: #{lstm_rnn_forward.1} parent=1 // pred_check_branch
      %25 = sbr.rel (0) target = $region17
    $region16: #{lstm_rnn_forward.1} parent=1 // pred_region
      _
    $region17: #{lstm_rnn_forward.1} parent=1 // pred_fallthru
      _
    // Predicated region
    $region18: #{lstm_rnn_forward.1} parent=1 // pred_check
      _
    $region19: #{lstm_rnn_forward.1} parent=1 // pred_check_branch
      %27 = sbr.rel (0) target = $region21
    $region20: #{lstm_rnn_forward.1} parent=1 // pred_region
      _
    $region21: #{lstm_rnn_forward.1} parent=1 // pred_fallthru
      _
    // Predicated region
    $region22: #{lstm_rnn_forward.1} parent=1 // pred_check
      _
    $region23: #{lstm_rnn_forward.1} parent=1 // pred_check_branch
      %29 = sbr.rel (0) target = $region25
    $region24: #{lstm_rnn_forward.1} parent=1 // pred_region
      _
    $region25: #{lstm_rnn_forward.1} parent=1 // pred_fallthru
      _
    %v30 = vld [vmem:[%s0] sm:$0xff]
    %v31 = vld [vmem:[%s0 + $0x8] sm:$0xff]
    %v32 = vld [vmem:[%s0 + $0x10] sm:$0xff]
    %v33 = vld [vmem:[%s0 + $0x18] sm:$0xff]
    %v34 = vld [vmem:[%s0 + $0x20] sm:$0xff]
    %v35 = vld [vmem:[%s0 + $0x28] sm:$0xff]
    %v36 = vld [vmem:[%s0 + $0x30] sm:$0xff]
    %v37 = vld [vmem:[%s0 + $0x38] sm:$0xff]
    %v38 = vld [vmem:[%s1] sm:$0xf]
    %v39 = vld [vmem:[%s3] sm:$0x1]
    %v41 = vperm.slane %v39, 0
    %vm43 = vcmask 31744
    %v45 = vsel %vm43, %v30, 0
    %v48 = vsel %vm43, %v31, 0
    %v51 = vsel %vm43, %v32, 0
    %v54 = vsel %vm43, %v33, 0
    %v57 = vsel %vm43, %v34, 0
    %v60 = vsel %vm43, %v35, 0
    %v63 = vsel %vm43, %v36, 0
    %v66 = vsel %vm43, %v37, 0
    %vm68 = vcmask 1043456
    %v70 = vsel %vm68, %v38, 0
    %72 = vmatpush.msra.mxu0 0.0
    %73 = vmatpush.msra.mxu0 0.0
    %74 = vmatpush.msra.mxu0 0.0
    %75 = vmatpush.msra.mxu0 0.0
    %76 = vmatpush.msra.mxu0 0.0
    %77 = vmatpush.msra.mxu0 0.0
    %78 = vmatpush.msra.mxu0 0.0
    %79 = vmatpush.msra.mxu0 0.0
    %80 = vmatpush.msra.mxu0 0.0
    %81 = vmatpush.msra.mxu0 0.0
    %82 = vmatpush.msra.mxu0 0.0
    %83 = vmatpush.msra.mxu0 0.0
    %84 = vmatpush.msra.mxu0 0.0
    %85 = vmatpush.msra.mxu0 0.0
    %86 = vmatpush.msra.mxu0 0.0
    %87 = vmatpush.msra.mxu0 %v70
    %88 = vmatmul.f32.gmra.mxu0 %v45
    %v89 = vpop.f32.mrf.mxu0
    %v90 = vadd.f32 %v41, %v89
    %91 = vmatmul.f32.gmra.mxu0 %v48
    %v92 = vpop.f32.mrf.mxu0
    %v93 = vadd.f32 %v41, %v92
    %94 = vmatmul.f32.gmra.mxu0 %v51
    %v95 = vpop.f32.mrf.mxu0
    %v96 = vadd.f32 %v41, %v95
    %97 = vmatmul.f32.gmra.mxu0 %v54
    %v98 = vpop.f32.mrf.mxu0
    %v99 = vadd.f32 %v41, %v98
    %100 = vmatmul.f32.gmra.mxu0 %v57
    %v101 = vpop.f32.mrf.mxu0
    %v102 = vadd.f32 %v41, %v101
    %103 = vmatmul.f32.gmra.mxu0 %v60
    %v104 = vpop.f32.mrf.mxu0
    %v105 = vadd.f32 %v41, %v104
    %106 = vmatmul.f32.gmra.mxu0 %v63
    %v107 = vpop.f32.mrf.mxu0
    %v108 = vadd.f32 %v41, %v107
    %109 = vmatmul.f32.gmra.mxu0 %v66
    %v110 = vpop.f32.mrf.mxu0
    %v111 = vadd.f32 %v41, %v110
    %112 = vdwg.mxu0
    %113 = vst [vmem:[#allocation2] sm:$0xff] %v90
    %114 = vst [vmem:[#allocation2 + $0x8] sm:$0xff] %v93
    %115 = vst [vmem:[#allocation2 + $0x10] sm:$0xff] %v96
    %116 = vst [vmem:[#allocation2 + $0x18] sm:$0xff] %v99
    %117 = vst [vmem:[#allocation2 + $0x20] sm:$0xff] %v102
    %118 = vst [vmem:[#allocation2 + $0x28] sm:$0xff] %v105
    %119 = vst [vmem:[#allocation2 + $0x30] sm:$0xff] %v108
    %120 = vst [vmem:[#allocation2 + $0x38] sm:$0xff] %v111
    %v121 = vld [vmem:[%s2] sm:$0xff]
    %v122 = vld [vmem:[%s2 + $0x8] sm:$0xff]
    %v123 = vld [vmem:[%s2 + $0x10] sm:$0xff]
    %v124 = vld [vmem:[%s2 + $0x18] sm:$0xff]
    %v125 = vlaneseq
    %v126 = vand.u32 %v125, 127
    %vm127 = vcmp.ge.s32.totalorder %v126, 64
    %vm128 = vcmp.lt.s32.totalorder %v126, 96
    %vm129 = vmand %vm127, %vm128
    %v130 = vld [vmem:[#allocation2] sm:$0xff]
    %vm131 = vcmask 261120
    %v133 = vsel %vm131, 0.0, 0
    %135 = vmatpush.msra.mxu0 0.0
    %136 = vmatpush.msra.mxu0 0.0
    %137 = vmatpush.msra.mxu0 0.0
    %138 = vmatpush.msra.mxu0 0.0
    %139 = vmatpush.msra.mxu0 0.0
    %140 = vmatpush.msra.mxu0 0.0
    %141 = vmatpush.msra.mxu0 0.0
    %142 = vmatpush.msra.mxu0 0.0
    %143 = vmatpush.msra.mxu0 0.0
    %144 = vmatpush.msra.mxu0 0.0
    %145 = vmatpush.msra.mxu0 0.0
    %146 = vmatpush.msra.mxu0 0.0
    %147 = vmatpush.msra.mxu0 %v124
    %148 = vmatpush.msra.mxu0 %v123
    %149 = vmatpush.msra.mxu0 %v122
    %150 = vmatpush.msra.mxu0 %v121
    %151 = vmatmul.f32.gmra.mxu0 %v133
    %v152 = vpop.f32.mrf.mxu0
    %v153 = vadd.f32 0.0, %v152
    %154 = vdwg.mxu0
    %v155 = vadd.f32 %v130, %v153
    %v156 = vtanh.pop %v155
    %v157 = vxor.u32 %v155, 2147483648
    %v158 = vmul.f32 %v157, 1.442695
    %v159 = vpow.pop %v158
    %v160 = vadd.f32 %v159, 1.0
    %v161 = vrcp.pop %v160
    %v162 = vmul.f32 %v160, %v161
    %v163 = vsub.f32 1.0, %v162
    %v164 = vmul.f32 %v161, %v163
    %v165 = vadd.f32 %v161, %v164
    %vm166 = vweird.f32 %v160
    %vm167 = vweird.f32 %v161
    %vm168 = vmor %vm166, %vm167
    %v169 = vsel %vm168, %v161, %v165
    %v170 = vand.u32 2147483647, %v160
    %vm171 = vcmp.eq.f32.partialorder %v170, 8.507059e+37
    %v172 = vand.u32 %v160, 2147483648
    %v173 = vor.u32 1.1754944e-38, %v172
    %v174 = vsel %vm171, %v173, %v169
    %v175 = vmul.f32 1.0, %v174
    %v176 = vsel %vm129, %v156, %v175
    %v177 = vmul.f32 %v176, 0.0
    %179 = vrot.lane.b32.xlu0 %v176, 64
    %v180 = vpop.permute.xlu0 %179
    %v182 = vmul.f32 %v176, %v180
    %184 = vrot.lane.b32.xlu0 %v182, 32
    %v185 = vpop.permute.xlu0 %184
    %v187 = vadd.f32 %v177, %v185
    %v188 = vtanh.pop %v187
    %190 = vrot.lane.b32.xlu0 %v188, 64
    %v191 = vpop.permute.xlu0 %190
    %v193 = vmul.f32 %v176, %v191
    %195 = vrot.lane.b32.xlu0 %v193, 32
    %v196 = vpop.permute.xlu0 %195
    %198 = vst.msk [vmem:[#allocation3] sm:$0xff] %vm131, %v196
    %s199 = scalar_lea.vmem [#allocation2], 8
    %v200 = vld [vmem:[%s199] sm:$0xff]
    %v201 = vsel %vm131, %v196, 0
    %203 = vmatpush.msra.mxu0 0.0
    %204 = vmatpush.msra.mxu0 0.0
    %205 = vmatpush.msra.mxu0 0.0
    %206 = vmatpush.msra.mxu0 0.0
    %207 = vmatpush.msra.mxu0 0.0
    %208 = vmatpush.msra.mxu0 0.0
    %209 = vmatpush.msra.mxu0 0.0
    %210 = vmatpush.msra.mxu0 0.0
    %211 = vmatpush.msra.mxu0 0.0
    %212 = vmatpush.msra.mxu0 0.0
    %213 = vmatpush.msra.mxu0 0.0
    %214 = vmatpush.msra.mxu0 0.0
    %215 = vmatpush.msra.mxu0 %v124
    %216 = vmatpush.msra.mxu0 %v123
    %217 = vmatpush.msra.mxu0 %v122
    %218 = vmatpush.msra.mxu0 %v121
    %219 = vmatmul.f32.gmra.mxu0 %v201
    %v220 = vpop.f32.mrf.mxu0
    %v221 = vadd.f32 0.0, %v220
    %222 = vdwg.mxu0
    %v223 = vadd.f32 %v200, %v221
    %v224 = vtanh.pop %v223
    %v225 = vxor.u32 %v223, 2147483648
    %v226 = vmul.f32 %v225, 1.442695
    %v227 = vpow.pop %v226
    %v228 = vadd.f32 %v227, 1.0
    %v229 = vrcp.pop %v228
    %v230 = vmul.f32 %v228, %v229
    %v231 = vsub.f32 1.0, %v230
    %v232 = vmul.f32 %v229, %v231
    %v233 = vadd.f32 %v229, %v232
    %vm234 = vweird.f32 %v228
    %vm235 = vweird.f32 %v229
    %vm236 = vmor %vm234, %vm235
    %v237 = vsel %vm236, %v229, %v233
    %v238 = vand.u32 2147483647, %v228
    %vm239 = vcmp.eq.f32.partialorder %v238, 8.507059e+37
    %v240 = vand.u32 %v228, 2147483648
    %v241 = vor.u32 1.1754944e-38, %v240
    %v242 = vsel %vm239, %v241, %v237
    %v243 = vmul.f32 1.0, %v242
    %v244 = vsel %vm129, %v224, %v243
    %v245 = vmul.f32 %v244, %v187
    %247 = vrot.lane.b32.xlu0 %v244, 64
    %v248 = vpop.permute.xlu0 %247
    %v250 = vmul.f32 %v244, %v248
    %252 = vrot.lane.b32.xlu0 %v250, 32
    %v253 = vpop.permute.xlu0 %252
    %v255 = vadd.f32 %v245, %v253
    %v256 = vtanh.pop %v255
    %258 = vrot.lane.b32.xlu0 %v256, 64
    %v259 = vpop.permute.xlu0 %258
    %v261 = vmul.f32 %v244, %v259
    %263 = vrot.lane.b32.xlu0 %v261, 32
    %v264 = vpop.permute.xlu0 %263
    %s266 = scalar_lea.vmem [#allocation3], 8
    %267 = vst.msk [vmem:[%s266] sm:$0xff] %vm131, %v264
    %s268 = scalar_lea.vmem [#allocation2], 16
    %v269 = vld [vmem:[%s268] sm:$0xff]
    %v270 = vsel %vm131, %v264, 0
    %272 = vmatpush.msra.mxu0 0.0
    %273 = vmatpush.msra.mxu0 0.0
    %274 = vmatpush.msra.mxu0 0.0
    %275 = vmatpush.msra.mxu0 0.0
    %276 = vmatpush.msra.mxu0 0.0
    %277 = vmatpush.msra.mxu0 0.0
    %278 = vmatpush.msra.mxu0 0.0
    %279 = vmatpush.msra.mxu0 0.0
    %280 = vmatpush.msra.mxu0 0.0
    %281 = vmatpush.msra.mxu0 0.0
    %282 = vmatpush.msra.mxu0 0.0
    %283 = vmatpush.msra.mxu0 0.0
    %284 = vmatpush.msra.mxu0 %v124
    %285 = vmatpush.msra.mxu0 %v123
    %286 = vmatpush.msra.mxu0 %v122
    %287 = vmatpush.msra.mxu0 %v121
    %288 = vmatmul.f32.gmra.mxu0 %v270
    %v289 = vpop.f32.mrf.mxu0
    %v290 = vadd.f32 0.0, %v289
    %291 = vdwg.mxu0
    %v292 = vadd.f32 %v269, %v290
    %v293 = vtanh.pop %v292
    %v294 = vxor.u32 %v292, 2147483648
    %v295 = vmul.f32 %v294, 1.442695
    %v296 = vpow.pop %v295
    %v297 = vadd.f32 %v296, 1.0
    %v298 = vrcp.pop %v297
    %v299 = vmul.f32 %v297, %v298
    %v300 = vsub.f32 1.0, %v299
    %v301 = vmul.f32 %v298, %v300
    %v302 = vadd.f32 %v298, %v301
    %vm303 = vweird.f32 %v297
    %vm304 = vweird.f32 %v298
    %vm305 = vmor %vm303, %vm304
    %v306 = vsel %vm305, %v298, %v302
    %v307 = vand.u32 2147483647, %v297
    %vm308 = vcmp.eq.f32.partialorder %v307, 8.507059e+37
    %v309 = vand.u32 %v297, 2147483648
    %v310 = vor.u32 1.1754944e-38, %v309
    %v311 = vsel %vm308, %v310, %v306
    %v312 = vmul.f32 1.0, %v311
    %v313 = vsel %vm129, %v293, %v312
    %v314 = vmul.f32 %v313, %v255
    %316 = vrot.lane.b32.xlu0 %v313, 64
    %v317 = vpop.permute.xlu0 %316
    %v319 = vmul.f32 %v313, %v317
    %321 = vrot.lane.b32.xlu0 %v319, 32
    %v322 = vpop.permute.xlu0 %321
    %v324 = vadd.f32 %v314, %v322
    %v325 = vtanh.pop %v324
    %327 = vrot.lane.b32.xlu0 %v325, 64
    %v328 = vpop.permute.xlu0 %327
    %v330 = vmul.f32 %v313, %v328
    %332 = vrot.lane.b32.xlu0 %v330, 32
    %v333 = vpop.permute.xlu0 %332
    %s335 = scalar_lea.vmem [#allocation3], 16
    %336 = vst.msk [vmem:[%s335] sm:$0xff] %vm131, %v333
    %s337 = scalar_lea.vmem [#allocation2], 24
    %v338 = vld [vmem:[%s337] sm:$0xff]
    %v339 = vsel %vm131, %v333, 0
    %341 = vmatpush.msra.mxu0 0.0
    %342 = vmatpush.msra.mxu0 0.0
    %343 = vmatpush.msra.mxu0 0.0
    %344 = vmatpush.msra.mxu0 0.0
    %345 = vmatpush.msra.mxu0 0.0
    %346 = vmatpush.msra.mxu0 0.0
    %347 = vmatpush.msra.mxu0 0.0
    %348 = vmatpush.msra.mxu0 0.0
    %349 = vmatpush.msra.mxu0 0.0
    %350 = vmatpush.msra.mxu0 0.0
    %351 = vmatpush.msra.mxu0 0.0
    %352 = vmatpush.msra.mxu0 0.0
    %353 = vmatpush.msra.mxu0 %v124
    %354 = vmatpush.msra.mxu0 %v123
    %355 = vmatpush.msra.mxu0 %v122
    %356 = vmatpush.msra.mxu0 %v121
    %357 = vmatmul.f32.gmra.mxu0 %v339
    %v358 = vpop.f32.mrf.mxu0
    %v359 = vadd.f32 0.0, %v358
    %360 = vdwg.mxu0
    %v361 = vadd.f32 %v338, %v359
    %v362 = vtanh.pop %v361
    %v363 = vxor.u32 %v361, 2147483648
    %v364 = vmul.f32 %v363, 1.442695
    %v365 = vpow.pop %v364
    %v366 = vadd.f32 %v365, 1.0
    %v367 = vrcp.pop %v366
    %v368 = vmul.f32 %v366, %v367
    %v369 = vsub.f32 1.0, %v368
    %v370 = vmul.f32 %v367, %v369
    %v371 = vadd.f32 %v367, %v370
    %vm372 = vweird.f32 %v366
    %vm373 = vweird.f32 %v367
    %vm374 = vmor %vm372, %vm373
    %v375 = vsel %vm374, %v367, %v371
    %v376 = vand.u32 2147483647, %v366
    %vm377 = vcmp.eq.f32.partialorder %v376, 8.507059e+37
    %v378 = vand.u32 %v366, 2147483648
    %v379 = vor.u32 1.1754944e-38, %v378
    %v380 = vsel %vm377, %v379, %v375
    %v381 = vmul.f32 1.0, %v380
    %v382 = vsel %vm129, %v362, %v381
    %v383 = vmul.f32 %v382, %v324
    %385 = vrot.lane.b32.xlu0 %v382, 64
    %v386 = vpop.permute.xlu0 %385
    %v388 = vmul.f32 %v382, %v386
    %390 = vrot.lane.b32.xlu0 %v388, 32
    %v391 = vpop.permute.xlu0 %390
    %v393 = vadd.f32 %v383, %v391
    %v394 = vtanh.pop %v393
    %396 = vrot.lane.b32.xlu0 %v394, 64
    %v397 = vpop.permute.xlu0 %396
    %v399 = vmul.f32 %v382, %v397
    %401 = vrot.lane.b32.xlu0 %v399, 32
    %v402 = vpop.permute.xlu0 %401
    %s404 = scalar_lea.vmem [#allocation3], 24
    %405 = vst.msk [vmem:[%s404] sm:$0xff] %vm131, %v402
    %s406 = scalar_lea.vmem [#allocation2], 32
    %v407 = vld [vmem:[%s406] sm:$0xff]
    %v408 = vsel %vm131, %v402, 0
    %410 = vmatpush.msra.mxu0 0.0
    %411 = vmatpush.msra.mxu0 0.0
    %412 = vmatpush.msra.mxu0 0.0
    %413 = vmatpush.msra.mxu0 0.0
    %414 = vmatpush.msra.mxu0 0.0
    %415 = vmatpush.msra.mxu0 0.0
    %416 = vmatpush.msra.mxu0 0.0
    %417 = vmatpush.msra.mxu0 0.0
    %418 = vmatpush.msra.mxu0 0.0
    %419 = vmatpush.msra.mxu0 0.0
    %420 = vmatpush.msra.mxu0 0.0
    %421 = vmatpush.msra.mxu0 0.0
    %422 = vmatpush.msra.mxu0 %v124
    %423 = vmatpush.msra.mxu0 %v123
    %424 = vmatpush.msra.mxu0 %v122
    %425 = vmatpush.msra.mxu0 %v121
    %426 = vmatmul.f32.gmra.mxu0 %v408
    %v427 = vpop.f32.mrf.mxu0
    %v428 = vadd.f32 0.0, %v427
    %429 = vdwg.mxu0
    %v430 = vadd.f32 %v407, %v428
    %v431 = vtanh.pop %v430
    %v432 = vxor.u32 %v430, 2147483648
    %v433 = vmul.f32 %v432, 1.442695
    %v434 = vpow.pop %v433
    %v435 = vadd.f32 %v434, 1.0
    %v436 = vrcp.pop %v435
    %v437 = vmul.f32 %v435, %v436
    %v438 = vsub.f32 1.0, %v437
    %v439 = vmul.f32 %v436, %v438
    %v440 = vadd.f32 %v436, %v439
    %vm441 = vweird.f32 %v435
    %vm442 = vweird.f32 %v436
    %vm443 = vmor %vm441, %vm442
    %v444 = vsel %vm443, %v436, %v440
    %v445 = vand.u32 2147483647, %v435
    %vm446 = vcmp.eq.f32.partialorder %v445, 8.507059e+37
    %v447 = vand.u32 %v435, 2147483648
    %v448 = vor.u32 1.1754944e-38, %v447
    %v449 = vsel %vm446, %v448, %v444
    %v450 = vmul.f32 1.0, %v449
    %v451 = vsel %vm129, %v431, %v450
    %v452 = vmul.f32 %v451, %v393
    %454 = vrot.lane.b32.xlu0 %v451, 64
    %v455 = vpop.permute.xlu0 %454
    %v457 = vmul.f32 %v451, %v455
    %459 = vrot.lane.b32.xlu0 %v457, 32
    %v460 = vpop.permute.xlu0 %459
    %v462 = vadd.f32 %v452, %v460
    %v463 = vtanh.pop %v462
    %465 = vrot.lane.b32.xlu0 %v463, 64
    %v466 = vpop.permute.xlu0 %465
    %v468 = vmul.f32 %v451, %v466
    %470 = vrot.lane.b32.xlu0 %v468, 32
    %v471 = vpop.permute.xlu0 %470
    %s473 = scalar_lea.vmem [#allocation3], 32
    %474 = vst.msk [vmem:[%s473] sm:$0xff] %vm131, %v471
    %s475 = scalar_lea.vmem [#allocation2], 40
    %v476 = vld [vmem:[%s475] sm:$0xff]
    %v477 = vsel %vm131, %v471, 0
    %479 = vmatpush.msra.mxu0 0.0
    %480 = vmatpush.msra.mxu0 0.0
    %481 = vmatpush.msra.mxu0 0.0
    %482 = vmatpush.msra.mxu0 0.0
    %483 = vmatpush.msra.mxu0 0.0
    %484 = vmatpush.msra.mxu0 0.0
    %485 = vmatpush.msra.mxu0 0.0
    %486 = vmatpush.msra.mxu0 0.0
    %487 = vmatpush.msra.mxu0 0.0
    %488 = vmatpush.msra.mxu0 0.0
    %489 = vmatpush.msra.mxu0 0.0
    %490 = vmatpush.msra.mxu0 0.0
    %491 = vmatpush.msra.mxu0 %v124
    %492 = vmatpush.msra.mxu0 %v123
    %493 = vmatpush.msra.mxu0 %v122
    %494 = vmatpush.msra.mxu0 %v121
    %495 = vmatmul.f32.gmra.mxu0 %v477
    %v496 = vpop.f32.mrf.mxu0
    %v497 = vadd.f32 0.0, %v496
    %498 = vdwg.mxu0
    %v499 = vadd.f32 %v476, %v497
    %v500 = vtanh.pop %v499
    %v501 = vxor.u32 %v499, 2147483648
    %v502 = vmul.f32 %v501, 1.442695
    %v503 = vpow.pop %v502
    %v504 = vadd.f32 %v503, 1.0
    %v505 = vrcp.pop %v504
    %v506 = vmul.f32 %v504, %v505
    %v507 = vsub.f32 1.0, %v506
    %v508 = vmul.f32 %v505, %v507
    %v509 = vadd.f32 %v505, %v508
    %vm510 = vweird.f32 %v504
    %vm511 = vweird.f32 %v505
    %vm512 = vmor %vm510, %vm511
    %v513 = vsel %vm512, %v505, %v509
    %v514 = vand.u32 2147483647, %v504
    %vm515 = vcmp.eq.f32.partialorder %v514, 8.507059e+37
    %v516 = vand.u32 %v504, 2147483648
    %v517 = vor.u32 1.1754944e-38, %v516
    %v518 = vsel %vm515, %v517, %v513
    %v519 = vmul.f32 1.0, %v518
    %v520 = vsel %vm129, %v500, %v519
    %v521 = vmul.f32 %v520, %v462
    %523 = vrot.lane.b32.xlu0 %v520, 64
    %v524 = vpop.permute.xlu0 %523
    %v526 = vmul.f32 %v520, %v524
    %528 = vrot.lane.b32.xlu0 %v526, 32
    %v529 = vpop.permute.xlu0 %528
    %v531 = vadd.f32 %v521, %v529
    %v532 = vtanh.pop %v531
    %534 = vrot.lane.b32.xlu0 %v532, 64
    %v535 = vpop.permute.xlu0 %534
    %v537 = vmul.f32 %v520, %v535
    %539 = vrot.lane.b32.xlu0 %v537, 32
    %v540 = vpop.permute.xlu0 %539
    %s542 = scalar_lea.vmem [#allocation3], 40
    %543 = vst.msk [vmem:[%s542] sm:$0xff] %vm131, %v540
    %s544 = scalar_lea.vmem [#allocation2], 48
    %v545 = vld [vmem:[%s544] sm:$0xff]
    %v546 = vsel %vm131, %v540, 0
    %548 = vmatpush.msra.mxu0 0.0
    %549 = vmatpush.msra.mxu0 0.0
    %550 = vmatpush.msra.mxu0 0.0
    %551 = vmatpush.msra.mxu0 0.0
    %552 = vmatpush.msra.mxu0 0.0
    %553 = vmatpush.msra.mxu0 0.0
    %554 = vmatpush.msra.mxu0 0.0
    %555 = vmatpush.msra.mxu0 0.0
    %556 = vmatpush.msra.mxu0 0.0
    %557 = vmatpush.msra.mxu0 0.0
    %558 = vmatpush.msra.mxu0 0.0
    %559 = vmatpush.msra.mxu0 0.0
    %560 = vmatpush.msra.mxu0 %v124
    %561 = vmatpush.msra.mxu0 %v123
    %562 = vmatpush.msra.mxu0 %v122
    %563 = vmatpush.msra.mxu0 %v121
    %564 = vmatmul.f32.gmra.mxu0 %v546
    %v565 = vpop.f32.mrf.mxu0
    %v566 = vadd.f32 0.0, %v565
    %567 = vdwg.mxu0
    %v568 = vadd.f32 %v545, %v566
    %v569 = vtanh.pop %v568
    %v570 = vxor.u32 %v568, 2147483648
    %v571 = vmul.f32 %v570, 1.442695
    %v572 = vpow.pop %v571
    %v573 = vadd.f32 %v572, 1.0
    %v574 = vrcp.pop %v573
    %v575 = vmul.f32 %v573, %v574
    %v576 = vsub.f32 1.0, %v575
    %v577 = vmul.f32 %v574, %v576
    %v578 = vadd.f32 %v574, %v577
    %vm579 = vweird.f32 %v573
    %vm580 = vweird.f32 %v574
    %vm581 = vmor %vm579, %vm580
    %v582 = vsel %vm581, %v574, %v578
    %v583 = vand.u32 2147483647, %v573
    %vm584 = vcmp.eq.f32.partialorder %v583, 8.507059e+37
    %v585 = vand.u32 %v573, 2147483648
    %v586 = vor.u32 1.1754944e-38, %v585
    %v587 = vsel %vm584, %v586, %v582
    %v588 = vmul.f32 1.0, %v587
    %v589 = vsel %vm129, %v569, %v588
    %v590 = vmul.f32 %v589, %v531
    %592 = vrot.lane.b32.xlu0 %v589, 64
    %v593 = vpop.permute.xlu0 %592
    %v595 = vmul.f32 %v589, %v593
    %597 = vrot.lane.b32.xlu0 %v595, 32
    %v598 = vpop.permute.xlu0 %597
    %v600 = vadd.f32 %v590, %v598
    %v601 = vtanh.pop %v600
    %603 = vrot.lane.b32.xlu0 %v601, 64
    %v604 = vpop.permute.xlu0 %603
    %v606 = vmul.f32 %v589, %v604
    %608 = vrot.lane.b32.xlu0 %v606, 32
    %v609 = vpop.permute.xlu0 %608
    %s611 = scalar_lea.vmem [#allocation3], 48
    %612 = vst.msk [vmem:[%s611] sm:$0xff] %vm131, %v609
    %s613 = scalar_lea.vmem [#allocation2], 56
    %v614 = vld [vmem:[%s613] sm:$0xff]
    %v615 = vsel %vm131, %v609, 0
    %617 = vmatpush.msra.mxu0 0.0
    %618 = vmatpush.msra.mxu0 0.0
    %619 = vmatpush.msra.mxu0 0.0
    %620 = vmatpush.msra.mxu0 0.0
    %621 = vmatpush.msra.mxu0 0.0
    %622 = vmatpush.msra.mxu0 0.0
    %623 = vmatpush.msra.mxu0 0.0
    %624 = vmatpush.msra.mxu0 0.0
    %625 = vmatpush.msra.mxu0 0.0
    %626 = vmatpush.msra.mxu0 0.0
    %627 = vmatpush.msra.mxu0 0.0
    %628 = vmatpush.msra.mxu0 0.0
    %629 = vmatpush.msra.mxu0 %v124
    %630 = vmatpush.msra.mxu0 %v123
    %631 = vmatpush.msra.mxu0 %v122
    %632 = vmatpush.msra.mxu0 %v121
    %633 = vmatmul.f32.gmra.mxu0 %v615
    %v634 = vpop.f32.mrf.mxu0
    %v635 = vadd.f32 0.0, %v634
    %636 = vdwg.mxu0
    %v637 = vadd.f32 %v614, %v635
    %v638 = vtanh.pop %v637
    %v639 = vxor.u32 %v637, 2147483648
    %v640 = vmul.f32 %v639, 1.442695
    %v641 = vpow.pop %v640
    %v642 = vadd.f32 %v641, 1.0
    %v643 = vrcp.pop %v642
    %v644 = vmul.f32 %v642, %v643
    %v645 = vsub.f32 1.0, %v644
    %v646 = vmul.f32 %v643, %v645
    %v647 = vadd.f32 %v643, %v646
    %vm648 = vweird.f32 %v642
    %vm649 = vweird.f32 %v643
    %vm650 = vmor %vm648, %vm649
    %v651 = vsel %vm650, %v643, %v647
    %v652 = vand.u32 2147483647, %v642
    %vm653 = vcmp.eq.f32.partialorder %v652, 8.507059e+37
    %v654 = vand.u32 %v642, 2147483648
    %v655 = vor.u32 1.1754944e-38, %v654
    %v656 = vsel %vm653, %v655, %v651
    %v657 = vmul.f32 1.0, %v656
    %v658 = vsel %vm129, %v638, %v657
    %v659 = vmul.f32 %v658, %v600
    %661 = vrot.lane.b32.xlu0 %v658, 64
    %v662 = vpop.permute.xlu0 %661
    %v664 = vmul.f32 %v658, %v662
    %666 = vrot.lane.b32.xlu0 %v664, 32
    %v667 = vpop.permute.xlu0 %666
    %v669 = vadd.f32 %v659, %v667
    %v670 = vtanh.pop %v669
    %672 = vrot.lane.b32.xlu0 %v670, 64
    %v673 = vpop.permute.xlu0 %672
    %v675 = vmul.f32 %v658, %v673
    %677 = vrot.lane.b32.xlu0 %v675, 32
    %v678 = vpop.permute.xlu0 %677
    %s680 = scalar_lea.vmem [#allocation3], 56
    %681 = vst.msk [vmem:[%s680] sm:$0xff] %vm131, %v678
    %v682 = vld [vmem:[#allocation3] sm:$0xff]
    %v683 = vld [vmem:[#allocation3 + $0x8] sm:$0xff]
    %v684 = vld [vmem:[#allocation3 + $0x10] sm:$0xff]
    %v685 = vld [vmem:[#allocation3 + $0x18] sm:$0xff]
    %v686 = vld [vmem:[#allocation3 + $0x20] sm:$0xff]
    %v687 = vld [vmem:[#allocation3 + $0x28] sm:$0xff]
    %v688 = vld [vmem:[#allocation3 + $0x30] sm:$0xff]
    %v689 = vld [vmem:[#allocation3 + $0x38] sm:$0xff]
    %v690 = vld [vmem:[%s4] sm:$0x1]
    %v692 = vperm.slane %v690, 0
    %v694 = vmul.f32 %v682, %v692
    %v695 = vmul.f32 %v683, %v692
    %v696 = vmul.f32 %v684, %v692
    %v697 = vmul.f32 %v685, %v692
    %v698 = vmul.f32 %v686, %v692
    %v699 = vmul.f32 %v687, %v692
    %v700 = vmul.f32 %v688, %v692
    %v701 = vmul.f32 %v689, %v692
    %v702 = vsel %vm131, %v694, 0.0
    %703 = vadd.xlane.f32.xlu0 %v702
    %v704 = vpop.xlane.xlu0 %703
    %v705 = vsel %vm131, %v695, 0.0
    %706 = vadd.xlane.f32.xlu0 %v705
    %v707 = vpop.xlane.xlu0 %706
    %v708 = vsel %vm131, %v696, 0.0
    %709 = vadd.xlane.f32.xlu0 %v708
    %v710 = vpop.xlane.xlu0 %709
    %v711 = vsel %vm131, %v697, 0.0
    %712 = vadd.xlane.f32.xlu0 %v711
    %v713 = vpop.xlane.xlu0 %712
    %v714 = vsel %vm131, %v698, 0.0
    %715 = vadd.xlane.f32.xlu0 %v714
    %v716 = vpop.xlane.xlu0 %715
    %v717 = vsel %vm131, %v699, 0.0
    %718 = vadd.xlane.f32.xlu0 %v717
    %v719 = vpop.xlane.xlu0 %718
    %v720 = vsel %vm131, %v700, 0.0
    %721 = vadd.xlane.f32.xlu0 %v720
    %v722 = vpop.xlane.xlu0 %721
    %v723 = vsel %vm131, %v701, 0.0
    %724 = vadd.xlane.f32.xlu0 %v723
    %v725 = vpop.xlane.xlu0 %724
    %v726 = vld [vmem:[#allocation4] sm:$0x1]
    %v728 = vperm.slane %v726, 0
    %v730 = vadd.f32 %v704, %v728
    %v731 = vadd.f32 %v707, %v728
    %v732 = vadd.f32 %v710, %v728
    %v733 = vadd.f32 %v713, %v728
    %v734 = vadd.f32 %v716, %v728
    %v735 = vadd.f32 %v719, %v728
    %v736 = vadd.f32 %v722, %v728
    %v737 = vadd.f32 %v725, %v728
    %vm738 = vcmask 7168
    %739 = vst.msk [vmem:[%s6] sm:$0xff] %vm738, %v730
    %740 = vst.msk [vmem:[%s6 + $0x8] sm:$0xff] %vm738, %v731
    %741 = vst.msk [vmem:[%s6 + $0x10] sm:$0xff] %vm738, %v732
    %742 = vst.msk [vmem:[%s6 + $0x18] sm:$0xff] %vm738, %v733
    %743 = vst.msk [vmem:[%s6 + $0x20] sm:$0xff] %vm738, %v734
    %744 = vst.msk [vmem:[%s6 + $0x28] sm:$0xff] %vm738, %v735
    %745 = vst.msk [vmem:[%s6 + $0x30] sm:$0xff] %vm738, %v736
    %746 = vst.msk [vmem:[%s6 + $0x38] sm:$0xff] %vm738, %v737
    %vm747 = vcmask 254976
    %748 = vst.msk [vmem:[#allocation5] sm:$0x3] %vm747, %v678
    %750 = vrot.lane.b32.xlu0 %v669, 96
    %v751 = vpop.permute.xlu0 %750
    %753 = vst.msk [vmem:[#allocation7] sm:$0x3] %vm747, %v751
    // Predicated region
    $region26: #{lstm_rnn_forward.1} parent=1 // pred_check
      _
    $region27: #{lstm_rnn_forward.1} parent=1 // pred_check_branch
      %755 = sbr.rel (0) target = $region29
    $region28: #{lstm_rnn_forward.1} parent=1 // pred_region
      _
    $region29: #{lstm_rnn_forward.1} parent=1 // pred_fallthru
      _
    // Predicated region
    $region30: #{lstm_rnn_forward.1} parent=1 // pred_check
      _
    $region31: #{lstm_rnn_forward.1} parent=1 // pred_check_branch
      %757 = sbr.rel (0) target = $region33
    $region32: #{lstm_rnn_forward.1} parent=1 // pred_region
      %759 = vsyncadd [#allocation6], 0
      %s761 = sshll.u32 [#allocation5], 4
      %s762 = int_to_ptr.vmem [resolvable:$true] %s761
      %s763 = sshll.u32 %s7, 4
      %s764 = int_to_ptr.hbm [resolvable:$true] %s763
      %766 = dma.vmem_to_hbm [thread:$0]  %s762, 32, %s764, [#allocation6]
    $region33: #{lstm_rnn_forward.1} parent=1 // pred_fallthru
      _
    // Predicated region
    $region34: #{lstm_rnn_forward.1} parent=1 // pred_check
      _
    $region35: #{lstm_rnn_forward.1} parent=1 // pred_check_branch
      %768 = sbr.rel (0) target = $region37
    $region36: #{lstm_rnn_forward.1} parent=1 // pred_region
      %770 = vsyncadd [#allocation8], 0
      %s772 = sshll.u32 [#allocation7], 4
      %s773 = int_to_ptr.vmem [resolvable:$true] %s772
      %s774 = sshll.u32 %s8, 4
      %s775 = int_to_ptr.hbm [resolvable:$true] %s774
      %777 = dma.vmem_to_hbm [thread:$0]  %s773, 32, %s775, [#allocation8]
    $region37: #{lstm_rnn_forward.1} parent=1 // pred_fallthru
      _
    // Predicated region
    $region38: #{lstm_rnn_forward.1} parent=1 // pred_check
      _
    $region39: #{lstm_rnn_forward.1} parent=1 // pred_check_branch
      %779 = sbr.rel (0) target = $region41
    $region40: #{lstm_rnn_forward.1} parent=1 // pred_region
      _
    $region41: #{lstm_rnn_forward.1} parent=1 // pred_fallthru
      _
    // Predicated region
    $region42: #{lstm_rnn_forward.1} parent=1 // pred_check
      _
    $region43: #{lstm_rnn_forward.1} parent=1 // pred_check_branch
      %781 = sbr.rel (0) target = $region45
    $region44: #{lstm_rnn_forward.1} parent=1 // pred_region
      %783 = dma.done [#allocation6], 32
    $region45: #{lstm_rnn_forward.1} parent=1 // pred_fallthru
      _
    // Predicated region
    $region46: #{lstm_rnn_forward.1} parent=1 // pred_check
      _
    $region47: #{lstm_rnn_forward.1} parent=1 // pred_check_branch
      %785 = sbr.rel (0) target = $region49
    $region48: #{lstm_rnn_forward.1} parent=1 // pred_region
      %787 = dma.done [#allocation8], 32
    $region49: #{lstm_rnn_forward.1} parent=1 // pred_fallthru
      _
    %788 = vsyncpa [#allocation6], 1
    %789 = vsyncpa [#allocation8], 1

</llo_original>
